<compile_context>
chip_gen: v7x
topology: tpu7x:2x2x1
jax: 0.10.0
libtpu: 0.0.40
codegen_flags: <defaults>
</compile_context>

<pallas_src>
import jax
import jax.numpy as jnp
import numpy as np
from jax import lax
from jax.experimental import pallas as pl
from jax.experimental.pallas import tpu as pltpu


def _lstm_fc_kernel(x_ref, wih_ref, whh_ref, b_ref, wfc_ref, bfc_ref, out_ref):
    """Single-invocation LSTM + FC.

    x_ref   : (T*B, I)  time-major flattened input
    wih_ref : (I, 4H)   W_ih^T
    whh_ref : (H, 4H)   W_hh^T
    b_ref   : (1, 4H)   b_ih + b_hh (pre-added on host)
    wfc_ref : (H, O)    W_fc^T
    bfc_ref : (1, O)
    out_ref : (B, O)
    """
    TB, _ = x_ref.shape
    H = whh_ref.shape[0]
    B = out_ref.shape[0]
    T = TB // B

    # Hoisted input projection for ALL timesteps in one MXU matmul.
    x_proj = (jnp.dot(x_ref[...], wih_ref[...],
                      preferred_element_type=jnp.float32)
              + b_ref[...])                                   # (T*B, 4H)

    whh = whh_ref[...]                                        # (H, 4H), resident
    h = jnp.zeros((B, H), jnp.float32)
    c = jnp.zeros((B, H), jnp.float32)

    # Static, fully-unrolled recurrence (T is a compile-time constant).
    for t in range(T):
        gates = x_proj[t * B:(t + 1) * B, :] + jnp.dot(
            h, whh, preferred_element_type=jnp.float32)       # (B, 4H)
        i_g = jax.nn.sigmoid(gates[:, 0 * H:1 * H])
        f_g = jax.nn.sigmoid(gates[:, 1 * H:2 * H])
        g_g = jnp.tanh(gates[:, 2 * H:3 * H])
        o_g = jax.nn.sigmoid(gates[:, 3 * H:4 * H])
        c = f_g * c + i_g * g_g
        h = o_g * jnp.tanh(c)

    # Final Linear on the last hidden state (one-shot).
    out_ref[...] = (jnp.dot(h, wfc_ref[...], preferred_element_type=jnp.float32)
                    + bfc_ref[...]).astype(out_ref.dtype)


@jax.jit
def lightweight_lstm_forward(x, params):
    """x: (B, T, I) batch_first, like the PyTorch module."""
    w_ih, w_hh, b_ih, b_hh, w_fc, b_fc = params      # PyTorch shapes:
    # w_ih (4H, I), w_hh (4H, H), b_ih (4H,), b_hh (4H,), w_fc (O, H), b_fc (O,)
    B, T, I = x.shape
    H = w_hh.shape[1]
    O = w_fc.shape[0]

    # Time-major flattening so each step's rows of the hoisted projection are
    # the contiguous static slice [t*B:(t+1)*B].  Trivial at this size and it
    # fuses into the copy feeding the kernel under jit.
    x_tb = jnp.transpose(x, (1, 0, 2)).reshape(T * B, I)
    wih_t = w_ih.T                                   # (I, 4H)
    whh_t = w_hh.T                                   # (H, 4H)
    wfc_t = w_fc.T                                   # (H, O)
    b = (b_ih + b_hh).reshape(1, 4 * H)              # pre-added bias
    bfc = b_fc.reshape(1, O)

    def vmem():
        return pl.BlockSpec(memory_space=pltpu.MemorySpace.VMEM)

    return pl.pallas_call(
        _lstm_fc_kernel,
        out_shape=jax.ShapeDtypeStruct((B, O), jnp.float32),
        in_specs=[vmem() for _ in range(6)],
        out_specs=vmem(),
    )(x_tb, wih_t, whh_t, b, wfc_t, bfc)


def _reference_forward(x, params):
    """Pure-JAX reference matching PyTorch nn.LSTM + nn.Linear semantics."""
    w_ih, w_hh, b_ih, b_hh, w_fc, b_fc = params
    B, T, I = x.shape
    H = w_hh.shape[1]

    def step(carry, x_t):
        h, c = carry
        gates = x_t @ w_ih.T + b_ih + h @ w_hh.T + b_hh
        i = jax.nn.sigmoid(gates[:, 0 * H:1 * H])
        f = jax.nn.sigmoid(gates[:, 1 * H:2 * H])
        g = jnp.tanh(gates[:, 2 * H:3 * H])
        o = jax.nn.sigmoid(gates[:, 3 * H:4 * H])
        c = f * c + i * g
        h = o * jnp.tanh(c)
        return (h, c), h

    h0 = jnp.zeros((B, H), jnp.float32)
    c0 = jnp.zeros((B, H), jnp.float32)
    (_, _), hs = lax.scan(step, (h0, c0), jnp.transpose(x, (1, 0, 2)))
    last = hs[-1]
    return last @ w_fc.T + b_fc


def init_params(key, input_size, hidden_size, output_size):
    """Deterministic PyTorch-style U(-1/sqrt(H), 1/sqrt(H)) init."""
    ks = jax.random.split(key, 6)
    H = hidden_size
    s_lstm = 1.0 / np.sqrt(H)
    s_fc = 1.0 / np.sqrt(H)
    w_ih = jax.random.uniform(ks[0], (4 * H, input_size), jnp.float32, -s_lstm, s_lstm)
    w_hh = jax.random.uniform(ks[1], (4 * H, H), jnp.float32, -s_lstm, s_lstm)
    b_ih = jax.random.uniform(ks[2], (4 * H,), jnp.float32, -s_lstm, s_lstm)
    b_hh = jax.random.uniform(ks[3], (4 * H,), jnp.float32, -s_lstm, s_lstm)
    w_fc = jax.random.uniform(ks[4], (output_size, H), jnp.float32, -s_fc, s_fc)
    b_fc = jax.random.uniform(ks[5], (output_size,), jnp.float32, -s_fc, s_fc)
    return (w_ih, w_hh, b_ih, b_hh, w_fc, b_fc)


if __name__ == "__main__":
    input_size, hidden_size, output_size = 16, 32, 8
    width_multiplier = 1.0
    adjusted_hidden = int(hidden_size * width_multiplier)
    B, T = 2, 8

    key = jax.random.PRNGKey(0)
    k_x, k_p = jax.random.split(key)
    x = jax.random.normal(k_x, (B, T, input_size), jnp.float32)
    params = init_params(k_p, input_size, adjusted_hidden, output_size)

    out = lightweight_lstm_forward(x, params)
    out = jax.block_until_ready(out)

    ref = _reference_forward(x, params)
    np.testing.assert_allclose(np.asarray(out), np.asarray(ref), rtol=1e-5, atol=1e-5)

    print("KERNEL_OK")
</pallas_src>

<mosaic_0001>
module attributes {stable_mosaic.version = 11 : i64} {
  func.func @_lstm_fc_kernel(%arg0: memref<16x16xf32, #tpu.memory_space<vmem>>, %arg1: memref<16x128xf32, #tpu.memory_space<vmem>>, %arg2: memref<32x128xf32, #tpu.memory_space<vmem>>, %arg3: memref<1x128xf32, #tpu.memory_space<vmem>>, %arg4: memref<32x8xf32, #tpu.memory_space<vmem>>, %arg5: memref<1x8xf32, #tpu.memory_space<vmem>>, %arg6: memref<2x8xf32, #tpu.memory_space<vmem>>) attributes {dimension_semantics = [], scalar_prefetch = 0 : i64, scratch_operands = 0 : i64, tpu.core_type = #tpu.core_type<tc>} {
    %c0 = arith.constant 0 : index
    %c0_0 = arith.constant 0 : index
    %0 = vector.load %arg0[%c0, %c0_0] : memref<16x16xf32, #tpu.memory_space<vmem>>, vector<16x16xf32>
    %c0_1 = arith.constant 0 : index
    %c0_2 = arith.constant 0 : index
    %1 = vector.load %arg1[%c0_1, %c0_2] : memref<16x128xf32, #tpu.memory_space<vmem>>, vector<16x128xf32>
    %cst = arith.constant dense<0.000000e+00> : vector<16x128xf32>
    %2 = tpu.matmul %0, %1, %cst {dimension_numbers = #tpu.dot_dimension_numbers<[1], [0], [0], [1], [0, 0, 1, 1], [], []>} : vector<16x16xf32>, vector<16x128xf32>, vector<16x128xf32> -> vector<16x128xf32>
    %c0_3 = arith.constant 0 : index
    %c0_4 = arith.constant 0 : index
    %3 = vector.load %arg3[%c0_3, %c0_4] : memref<1x128xf32, #tpu.memory_space<vmem>>, vector<1x128xf32>
    %4 = vector.broadcast %3 : vector<1x128xf32> to vector<16x128xf32>
    %5 = arith.addf %2, %4 : vector<16x128xf32>
    %c0_5 = arith.constant 0 : index
    %c0_6 = arith.constant 0 : index
    %6 = vector.load %arg2[%c0_5, %c0_6] : memref<32x128xf32, #tpu.memory_space<vmem>>, vector<32x128xf32>
    %cst_7 = arith.constant 0.000000e+00 : f32
    %7 = vector.broadcast %cst_7 : f32 to vector<2x32xf32>
    %cst_8 = arith.constant 0.000000e+00 : f32
    %8 = vector.broadcast %cst_8 : f32 to vector<2x32xf32>
    %9 = vector.extract_strided_slice %5 {offsets = [0, 0], sizes = [2, 128], strides = [1, 1]} : vector<16x128xf32> to vector<2x128xf32>
    %cst_9 = arith.constant dense<0.000000e+00> : vector<2x128xf32>
    %10 = tpu.matmul %7, %6, %cst_9 {dimension_numbers = #tpu.dot_dimension_numbers<[1], [0], [0], [1], [0, 0, 1, 1], [], []>} : vector<2x32xf32>, vector<32x128xf32>, vector<2x128xf32> -> vector<2x128xf32>
    %11 = arith.addf %9, %10 : vector<2x128xf32>
    %12 = vector.extract_strided_slice %11 {offsets = [0, 0], sizes = [2, 32], strides = [1, 1]} : vector<2x128xf32> to vector<2x32xf32>
    %13 = arith.negf %12 : vector<2x32xf32>
    %14 = math.exp %13 : vector<2x32xf32>
    %cst_10 = arith.constant 1.000000e+00 : f32
    %15 = vector.broadcast %cst_10 : f32 to vector<2x32xf32>
    %16 = arith.addf %15, %14 : vector<2x32xf32>
    %17 = arith.divf %15, %16 : vector<2x32xf32>
    %18 = vector.extract_strided_slice %11 {offsets = [0, 32], sizes = [2, 32], strides = [1, 1]} : vector<2x128xf32> to vector<2x32xf32>
    %19 = arith.negf %18 : vector<2x32xf32>
    %20 = math.exp %19 : vector<2x32xf32>
    %cst_11 = arith.constant 1.000000e+00 : f32
    %21 = vector.broadcast %cst_11 : f32 to vector<2x32xf32>
    %22 = arith.addf %21, %20 : vector<2x32xf32>
    %23 = arith.divf %21, %22 : vector<2x32xf32>
    %24 = vector.extract_strided_slice %11 {offsets = [0, 64], sizes = [2, 32], strides = [1, 1]} : vector<2x128xf32> to vector<2x32xf32>
    %25 = math.tanh %24 : vector<2x32xf32>
    %26 = vector.extract_strided_slice %11 {offsets = [0, 96], sizes = [2, 32], strides = [1, 1]} : vector<2x128xf32> to vector<2x32xf32>
    %27 = arith.negf %26 : vector<2x32xf32>
    %28 = math.exp %27 : vector<2x32xf32>
    %cst_12 = arith.constant 1.000000e+00 : f32
    %29 = vector.broadcast %cst_12 : f32 to vector<2x32xf32>
    %30 = arith.addf %29, %28 : vector<2x32xf32>
    %31 = arith.divf %29, %30 : vector<2x32xf32>
    %32 = arith.mulf %23, %8 : vector<2x32xf32>
    %33 = arith.mulf %17, %25 : vector<2x32xf32>
    %34 = arith.addf %32, %33 : vector<2x32xf32>
    %35 = math.tanh %34 : vector<2x32xf32>
    %36 = arith.mulf %31, %35 : vector<2x32xf32>
    %37 = vector.extract_strided_slice %5 {offsets = [2, 0], sizes = [2, 128], strides = [1, 1]} : vector<16x128xf32> to vector<2x128xf32>
    %cst_13 = arith.constant dense<0.000000e+00> : vector<2x128xf32>
    %38 = tpu.matmul %36, %6, %cst_13 {dimension_numbers = #tpu.dot_dimension_numbers<[1], [0], [0], [1], [0, 0, 1, 1], [], []>} : vector<2x32xf32>, vector<32x128xf32>, vector<2x128xf32> -> vector<2x128xf32>
    %39 = arith.addf %37, %38 : vector<2x128xf32>
    %40 = vector.extract_strided_slice %39 {offsets = [0, 0], sizes = [2, 32], strides = [1, 1]} : vector<2x128xf32> to vector<2x32xf32>
    %41 = arith.negf %40 : vector<2x32xf32>
    %42 = math.exp %41 : vector<2x32xf32>
    %cst_14 = arith.constant 1.000000e+00 : f32
    %43 = vector.broadcast %cst_14 : f32 to vector<2x32xf32>
    %44 = arith.addf %43, %42 : vector<2x32xf32>
    %45 = arith.divf %43, %44 : vector<2x32xf32>
    %46 = vector.extract_strided_slice %39 {offsets = [0, 32], sizes = [2, 32], strides = [1, 1]} : vector<2x128xf32> to vector<2x32xf32>
    %47 = arith.negf %46 : vector<2x32xf32>
    %48 = math.exp %47 : vector<2x32xf32>
    %cst_15 = arith.constant 1.000000e+00 : f32
    %49 = vector.broadcast %cst_15 : f32 to vector<2x32xf32>
    %50 = arith.addf %49, %48 : vector<2x32xf32>
    %51 = arith.divf %49, %50 : vector<2x32xf32>
    %52 = vector.extract_strided_slice %39 {offsets = [0, 64], sizes = [2, 32], strides = [1, 1]} : vector<2x128xf32> to vector<2x32xf32>
    %53 = math.tanh %52 : vector<2x32xf32>
    %54 = vector.extract_strided_slice %39 {offsets = [0, 96], sizes = [2, 32], strides = [1, 1]} : vector<2x128xf32> to vector<2x32xf32>
    %55 = arith.negf %54 : vector<2x32xf32>
    %56 = math.exp %55 : vector<2x32xf32>
    %cst_16 = arith.constant 1.000000e+00 : f32
    %57 = vector.broadcast %cst_16 : f32 to vector<2x32xf32>
    %58 = arith.addf %57, %56 : vector<2x32xf32>
    %59 = arith.divf %57, %58 : vector<2x32xf32>
    %60 = arith.mulf %51, %34 : vector<2x32xf32>
    %61 = arith.mulf %45, %53 : vector<2x32xf32>
    %62 = arith.addf %60, %61 : vector<2x32xf32>
    %63 = math.tanh %62 : vector<2x32xf32>
    %64 = arith.mulf %59, %63 : vector<2x32xf32>
    %65 = vector.extract_strided_slice %5 {offsets = [4, 0], sizes = [2, 128], strides = [1, 1]} : vector<16x128xf32> to vector<2x128xf32>
    %cst_17 = arith.constant dense<0.000000e+00> : vector<2x128xf32>
    %66 = tpu.matmul %64, %6, %cst_17 {dimension_numbers = #tpu.dot_dimension_numbers<[1], [0], [0], [1], [0, 0, 1, 1], [], []>} : vector<2x32xf32>, vector<32x128xf32>, vector<2x128xf32> -> vector<2x128xf32>
    %67 = arith.addf %65, %66 : vector<2x128xf32>
    %68 = vector.extract_strided_slice %67 {offsets = [0, 0], sizes = [2, 32], strides = [1, 1]} : vector<2x128xf32> to vector<2x32xf32>
    %69 = arith.negf %68 : vector<2x32xf32>
    %70 = math.exp %69 : vector<2x32xf32>
    %cst_18 = arith.constant 1.000000e+00 : f32
    %71 = vector.broadcast %cst_18 : f32 to vector<2x32xf32>
    %72 = arith.addf %71, %70 : vector<2x32xf32>
    %73 = arith.divf %71, %72 : vector<2x32xf32>
    %74 = vector.extract_strided_slice %67 {offsets = [0, 32], sizes = [2, 32], strides = [1, 1]} : vector<2x128xf32> to vector<2x32xf32>
    %75 = arith.negf %74 : vector<2x32xf32>
    %76 = math.exp %75 : vector<2x32xf32>
    %cst_19 = arith.constant 1.000000e+00 : f32
    %77 = vector.broadcast %cst_19 : f32 to vector<2x32xf32>
    %78 = arith.addf %77, %76 : vector<2x32xf32>
    %79 = arith.divf %77, %78 : vector<2x32xf32>
    %80 = vector.extract_strided_slice %67 {offsets = [0, 64], sizes = [2, 32], strides = [1, 1]} : vector<2x128xf32> to vector<2x32xf32>
    %81 = math.tanh %80 : vector<2x32xf32>
    %82 = vector.extract_strided_slice %67 {offsets = [0, 96], sizes = [2, 32], strides = [1, 1]} : vector<2x128xf32> to vector<2x32xf32>
    %83 = arith.negf %82 : vector<2x32xf32>
    %84 = math.exp %83 : vector<2x32xf32>
    %cst_20 = arith.constant 1.000000e+00 : f32
    %85 = vector.broadcast %cst_20 : f32 to vector<2x32xf32>
    %86 = arith.addf %85, %84 : vector<2x32xf32>
    %87 = arith.divf %85, %86 : vector<2x32xf32>
    %88 = arith.mulf %79, %62 : vector<2x32xf32>
    %89 = arith.mulf %73, %81 : vector<2x32xf32>
    %90 = arith.addf %88, %89 : vector<2x32xf32>
    %91 = math.tanh %90 : vector<2x32xf32>
    %92 = arith.mulf %87, %91 : vector<2x32xf32>
    %93 = vector.extract_strided_slice %5 {offsets = [6, 0], sizes = [2, 128], strides = [1, 1]} : vector<16x128xf32> to vector<2x128xf32>
    %cst_21 = arith.constant dense<0.000000e+00> : vector<2x128xf32>
    %94 = tpu.matmul %92, %6, %cst_21 {dimension_numbers = #tpu.dot_dimension_numbers<[1], [0], [0], [1], [0, 0, 1, 1], [], []>} : vector<2x32xf32>, vector<32x128xf32>, vector<2x128xf32> -> vector<2x128xf32>
    %95 = arith.addf %93, %94 : vector<2x128xf32>
    %96 = vector.extract_strided_slice %95 {offsets = [0, 0], sizes = [2, 32], strides = [1, 1]} : vector<2x128xf32> to vector<2x32xf32>
    %97 = arith.negf %96 : vector<2x32xf32>
    %98 = math.exp %97 : vector<2x32xf32>
    %cst_22 = arith.constant 1.000000e+00 : f32
    %99 = vector.broadcast %cst_22 : f32 to vector<2x32xf32>
    %100 = arith.addf %99, %98 : vector<2x32xf32>
    %101 = arith.divf %99, %100 : vector<2x32xf32>
    %102 = vector.extract_strided_slice %95 {offsets = [0, 32], sizes = [2, 32], strides = [1, 1]} : vector<2x128xf32> to vector<2x32xf32>
    %103 = arith.negf %102 : vector<2x32xf32>
    %104 = math.exp %103 : vector<2x32xf32>
    %cst_23 = arith.constant 1.000000e+00 : f32
    %105 = vector.broadcast %cst_23 : f32 to vector<2x32xf32>
    %106 = arith.addf %105, %104 : vector<2x32xf32>
    %107 = arith.divf %105, %106 : vector<2x32xf32>
    %108 = vector.extract_strided_slice %95 {offsets = [0, 64], sizes = [2, 32], strides = [1, 1]} : vector<2x128xf32> to vector<2x32xf32>
    %109 = math.tanh %108 : vector<2x32xf32>
    %110 = vector.extract_strided_slice %95 {offsets = [0, 96], sizes = [2, 32], strides = [1, 1]} : vector<2x128xf32> to vector<2x32xf32>
    %111 = arith.negf %110 : vector<2x32xf32>
    %112 = math.exp %111 : vector<2x32xf32>
    %cst_24 = arith.constant 1.000000e+00 : f32
    %113 = vector.broadcast %cst_24 : f32 to vector<2x32xf32>
    %114 = arith.addf %113, %112 : vector<2x32xf32>
    %115 = arith.divf %113, %114 : vector<2x32xf32>
    %116 = arith.mulf %107, %90 : vector<2x32xf32>
    %117 = arith.mulf %101, %109 : vector<2x32xf32>
    %118 = arith.addf %116, %117 : vector<2x32xf32>
    %119 = math.tanh %118 : vector<2x32xf32>
    %120 = arith.mulf %115, %119 : vector<2x32xf32>
    %121 = vector.extract_strided_slice %5 {offsets = [8, 0], sizes = [2, 128], strides = [1, 1]} : vector<16x128xf32> to vector<2x128xf32>
    %cst_25 = arith.constant dense<0.000000e+00> : vector<2x128xf32>
    %122 = tpu.matmul %120, %6, %cst_25 {dimension_numbers = #tpu.dot_dimension_numbers<[1], [0], [0], [1], [0, 0, 1, 1], [], []>} : vector<2x32xf32>, vector<32x128xf32>, vector<2x128xf32> -> vector<2x128xf32>
    %123 = arith.addf %121, %122 : vector<2x128xf32>
    %124 = vector.extract_strided_slice %123 {offsets = [0, 0], sizes = [2, 32], strides = [1, 1]} : vector<2x128xf32> to vector<2x32xf32>
    %125 = arith.negf %124 : vector<2x32xf32>
    %126 = math.exp %125 : vector<2x32xf32>
    %cst_26 = arith.constant 1.000000e+00 : f32
    %127 = vector.broadcast %cst_26 : f32 to vector<2x32xf32>
    %128 = arith.addf %127, %126 : vector<2x32xf32>
    %129 = arith.divf %127, %128 : vector<2x32xf32>
    %130 = vector.extract_strided_slice %123 {offsets = [0, 32], sizes = [2, 32], strides = [1, 1]} : vector<2x128xf32> to vector<2x32xf32>
    %131 = arith.negf %130 : vector<2x32xf32>
    %132 = math.exp %131 : vector<2x32xf32>
    %cst_27 = arith.constant 1.000000e+00 : f32
    %133 = vector.broadcast %cst_27 : f32 to vector<2x32xf32>
    %134 = arith.addf %133, %132 : vector<2x32xf32>
    %135 = arith.divf %133, %134 : vector<2x32xf32>
    %136 = vector.extract_strided_slice %123 {offsets = [0, 64], sizes = [2, 32], strides = [1, 1]} : vector<2x128xf32> to vector<2x32xf32>
    %137 = math.tanh %136 : vector<2x32xf32>
    %138 = vector.extract_strided_slice %123 {offsets = [0, 96], sizes = [2, 32], strides = [1, 1]} : vector<2x128xf32> to vector<2x32xf32>
    %139 = arith.negf %138 : vector<2x32xf32>
    %140 = math.exp %139 : vector<2x32xf32>
    %cst_28 = arith.constant 1.000000e+00 : f32
    %141 = vector.broadcast %cst_28 : f32 to vector<2x32xf32>
    %142 = arith.addf %141, %140 : vector<2x32xf32>
    %143 = arith.divf %141, %142 : vector<2x32xf32>
    %144 = arith.mulf %135, %118 : vector<2x32xf32>
    %145 = arith.mulf %129, %137 : vector<2x32xf32>
    %146 = arith.addf %144, %145 : vector<2x32xf32>
    %147 = math.tanh %146 : vector<2x32xf32>
    %148 = arith.mulf %143, %147 : vector<2x32xf32>
    %149 = vector.extract_strided_slice %5 {offsets = [10, 0], sizes = [2, 128], strides = [1, 1]} : vector<16x128xf32> to vector<2x128xf32>
    %cst_29 = arith.constant dense<0.000000e+00> : vector<2x128xf32>
    %150 = tpu.matmul %148, %6, %cst_29 {dimension_numbers = #tpu.dot_dimension_numbers<[1], [0], [0], [1], [0, 0, 1, 1], [], []>} : vector<2x32xf32>, vector<32x128xf32>, vector<2x128xf32> -> vector<2x128xf32>
    %151 = arith.addf %149, %150 : vector<2x128xf32>
    %152 = vector.extract_strided_slice %151 {offsets = [0, 0], sizes = [2, 32], strides = [1, 1]} : vector<2x128xf32> to vector<2x32xf32>
    %153 = arith.negf %152 : vector<2x32xf32>
    %154 = math.exp %153 : vector<2x32xf32>
    %cst_30 = arith.constant 1.000000e+00 : f32
    %155 = vector.broadcast %cst_30 : f32 to vector<2x32xf32>
    %156 = arith.addf %155, %154 : vector<2x32xf32>
    %157 = arith.divf %155, %156 : vector<2x32xf32>
    %158 = vector.extract_strided_slice %151 {offsets = [0, 32], sizes = [2, 32], strides = [1, 1]} : vector<2x128xf32> to vector<2x32xf32>
    %159 = arith.negf %158 : vector<2x32xf32>
    %160 = math.exp %159 : vector<2x32xf32>
    %cst_31 = arith.constant 1.000000e+00 : f32
    %161 = vector.broadcast %cst_31 : f32 to vector<2x32xf32>
    %162 = arith.addf %161, %160 : vector<2x32xf32>
    %163 = arith.divf %161, %162 : vector<2x32xf32>
    %164 = vector.extract_strided_slice %151 {offsets = [0, 64], sizes = [2, 32], strides = [1, 1]} : vector<2x128xf32> to vector<2x32xf32>
    %165 = math.tanh %164 : vector<2x32xf32>
    %166 = vector.extract_strided_slice %151 {offsets = [0, 96], sizes = [2, 32], strides = [1, 1]} : vector<2x128xf32> to vector<2x32xf32>
    %167 = arith.negf %166 : vector<2x32xf32>
    %168 = math.exp %167 : vector<2x32xf32>
    %cst_32 = arith.constant 1.000000e+00 : f32
    %169 = vector.broadcast %cst_32 : f32 to vector<2x32xf32>
    %170 = arith.addf %169, %168 : vector<2x32xf32>
    %171 = arith.divf %169, %170 : vector<2x32xf32>
    %172 = arith.mulf %163, %146 : vector<2x32xf32>
    %173 = arith.mulf %157, %165 : vector<2x32xf32>
    %174 = arith.addf %172, %173 : vector<2x32xf32>
    %175 = math.tanh %174 : vector<2x32xf32>
    %176 = arith.mulf %171, %175 : vector<2x32xf32>
    %177 = vector.extract_strided_slice %5 {offsets = [12, 0], sizes = [2, 128], strides = [1, 1]} : vector<16x128xf32> to vector<2x128xf32>
    %cst_33 = arith.constant dense<0.000000e+00> : vector<2x128xf32>
    %178 = tpu.matmul %176, %6, %cst_33 {dimension_numbers = #tpu.dot_dimension_numbers<[1], [0], [0], [1], [0, 0, 1, 1], [], []>} : vector<2x32xf32>, vector<32x128xf32>, vector<2x128xf32> -> vector<2x128xf32>
    %179 = arith.addf %177, %178 : vector<2x128xf32>
    %180 = vector.extract_strided_slice %179 {offsets = [0, 0], sizes = [2, 32], strides = [1, 1]} : vector<2x128xf32> to vector<2x32xf32>
    %181 = arith.negf %180 : vector<2x32xf32>
    %182 = math.exp %181 : vector<2x32xf32>
    %cst_34 = arith.constant 1.000000e+00 : f32
    %183 = vector.broadcast %cst_34 : f32 to vector<2x32xf32>
    %184 = arith.addf %183, %182 : vector<2x32xf32>
    %185 = arith.divf %183, %184 : vector<2x32xf32>
    %186 = vector.extract_strided_slice %179 {offsets = [0, 32], sizes = [2, 32], strides = [1, 1]} : vector<2x128xf32> to vector<2x32xf32>
    %187 = arith.negf %186 : vector<2x32xf32>
    %188 = math.exp %187 : vector<2x32xf32>
    %cst_35 = arith.constant 1.000000e+00 : f32
    %189 = vector.broadcast %cst_35 : f32 to vector<2x32xf32>
    %190 = arith.addf %189, %188 : vector<2x32xf32>
    %191 = arith.divf %189, %190 : vector<2x32xf32>
    %192 = vector.extract_strided_slice %179 {offsets = [0, 64], sizes = [2, 32], strides = [1, 1]} : vector<2x128xf32> to vector<2x32xf32>
    %193 = math.tanh %192 : vector<2x32xf32>
    %194 = vector.extract_strided_slice %179 {offsets = [0, 96], sizes = [2, 32], strides = [1, 1]} : vector<2x128xf32> to vector<2x32xf32>
    %195 = arith.negf %194 : vector<2x32xf32>
    %196 = math.exp %195 : vector<2x32xf32>
    %cst_36 = arith.constant 1.000000e+00 : f32
    %197 = vector.broadcast %cst_36 : f32 to vector<2x32xf32>
    %198 = arith.addf %197, %196 : vector<2x32xf32>
    %199 = arith.divf %197, %198 : vector<2x32xf32>
    %200 = arith.mulf %191, %174 : vector<2x32xf32>
    %201 = arith.mulf %185, %193 : vector<2x32xf32>
    %202 = arith.addf %200, %201 : vector<2x32xf32>
    %203 = math.tanh %202 : vector<2x32xf32>
    %204 = arith.mulf %199, %203 : vector<2x32xf32>
    %205 = vector.extract_strided_slice %5 {offsets = [14, 0], sizes = [2, 128], strides = [1, 1]} : vector<16x128xf32> to vector<2x128xf32>
    %cst_37 = arith.constant dense<0.000000e+00> : vector<2x128xf32>
    %206 = tpu.matmul %204, %6, %cst_37 {dimension_numbers = #tpu.dot_dimension_numbers<[1], [0], [0], [1], [0, 0, 1, 1], [], []>} : vector<2x32xf32>, vector<32x128xf32>, vector<2x128xf32> -> vector<2x128xf32>
    %207 = arith.addf %205, %206 : vector<2x128xf32>
    %208 = vector.extract_strided_slice %207 {offsets = [0, 0], sizes = [2, 32], strides = [1, 1]} : vector<2x128xf32> to vector<2x32xf32>
    %209 = arith.negf %208 : vector<2x32xf32>
    %210 = math.exp %209 : vector<2x32xf32>
    %cst_38 = arith.constant 1.000000e+00 : f32
    %211 = vector.broadcast %cst_38 : f32 to vector<2x32xf32>
    %212 = arith.addf %211, %210 : vector<2x32xf32>
    %213 = arith.divf %211, %212 : vector<2x32xf32>
    %214 = vector.extract_strided_slice %207 {offsets = [0, 32], sizes = [2, 32], strides = [1, 1]} : vector<2x128xf32> to vector<2x32xf32>
    %215 = arith.negf %214 : vector<2x32xf32>
    %216 = math.exp %215 : vector<2x32xf32>
    %cst_39 = arith.constant 1.000000e+00 : f32
    %217 = vector.broadcast %cst_39 : f32 to vector<2x32xf32>
    %218 = arith.addf %217, %216 : vector<2x32xf32>
    %219 = arith.divf %217, %218 : vector<2x32xf32>
    %220 = vector.extract_strided_slice %207 {offsets = [0, 64], sizes = [2, 32], strides = [1, 1]} : vector<2x128xf32> to vector<2x32xf32>
    %221 = math.tanh %220 : vector<2x32xf32>
    %222 = vector.extract_strided_slice %207 {offsets = [0, 96], sizes = [2, 32], strides = [1, 1]} : vector<2x128xf32> to vector<2x32xf32>
    %223 = arith.negf %222 : vector<2x32xf32>
    %224 = math.exp %223 : vector<2x32xf32>
    %cst_40 = arith.constant 1.000000e+00 : f32
    %225 = vector.broadcast %cst_40 : f32 to vector<2x32xf32>
    %226 = arith.addf %225, %224 : vector<2x32xf32>
    %227 = arith.divf %225, %226 : vector<2x32xf32>
    %228 = arith.mulf %219, %202 : vector<2x32xf32>
    %229 = arith.mulf %213, %221 : vector<2x32xf32>
    %230 = arith.addf %228, %229 : vector<2x32xf32>
    %231 = math.tanh %230 : vector<2x32xf32>
    %232 = arith.mulf %227, %231 : vector<2x32xf32>
    %c0_41 = arith.constant 0 : index
    %c0_42 = arith.constant 0 : index
    %233 = vector.load %arg4[%c0_41, %c0_42] : memref<32x8xf32, #tpu.memory_space<vmem>>, vector<32x8xf32>
    %cst_43 = arith.constant dense<0.000000e+00> : vector<2x8xf32>
    %234 = tpu.matmul %232, %233, %cst_43 {dimension_numbers = #tpu.dot_dimension_numbers<[1], [0], [0], [1], [0, 0, 1, 1], [], []>} : vector<2x32xf32>, vector<32x8xf32>, vector<2x8xf32> -> vector<2x8xf32>
    %c0_44 = arith.constant 0 : index
    %c0_45 = arith.constant 0 : index
    %235 = vector.load %arg5[%c0_44, %c0_45] : memref<1x8xf32, #tpu.memory_space<vmem>>, vector<1x8xf32>
    %236 = vector.broadcast %235 : vector<1x8xf32> to vector<2x8xf32>
    %237 = arith.addf %234, %236 : vector<2x8xf32>
    %c0_46 = arith.constant 0 : index
    %c0_47 = arith.constant 0 : index
    %238 = vector.load %arg6[%c0_46, %c0_47] : memref<2x8xf32, #tpu.memory_space<vmem>>, vector<2x8xf32>
    tpu.vector_store %arg6[%c0_46, %c0_47], %237 {strides = array<i32>} : memref<2x8xf32, #tpu.memory_space<vmem>>, vector<2x8xf32>,
    return
  }
}

</mosaic_0001>

<llo_original>
// kernel: lightweight_lstm_forward.1
$region0: #{lightweight_lstm_forward.1}
  #allocation0 [shape = 'u32[]', space=smem, size = 0x4, offset = 0x4, fixed_abs, tag = 'smem constant byte address 0x4 - core index']
  #allocation1 [shape = 'u32[144,128]{1,0:T(1,128)}', space=vmem, size = 0x12000, scoped, tag = 'internal scratch']
  %s0 = inlined_call_operand.vmem [shape: f32[16,16], index: 0, kind: input, shape index: {}]
  %s1 = inlined_call_operand.vmem [shape: f32[16,128], index: 1, kind: input, shape index: {}]
  %s2 = inlined_call_operand.vmem [shape: f32[32,128], index: 2, kind: input, shape index: {}]
  %s3 = inlined_call_operand.vmem [shape: f32[1,128], index: 3, kind: input, shape index: {}]
  %s4 = inlined_call_operand.vmem [shape: f32[32,8], index: 4, kind: input, shape index: {}]
  %s5 = inlined_call_operand.vmem [shape: f32[1,8], index: 5, kind: input, shape index: {}]
  %s6 = inlined_call_operand.hbm [shape: f32[2,8], index: 6, kind: output, shape index: {}]
  %s7 = sld [smem:[#allocation0]]
  $region34: #{lightweight_lstm_forward.1} parent=0
    _
  %s9 = ssub.s32 1, %s7
  %s10 = scalar_select 0, %s9, %s7
  $region1: #{lightweight_lstm_forward.1} parent=0
    #allocation2 [shape = 'u8[1024]{0}', space=vmem, size = 0x400, scoped, tag = 'output window, operand 0, single buffered']
    #allocation3 [shape = 's32[1]{0}', space=sflag, size = 0x4, scoped, tag = 'scoped memory for lightweight_lstm_forward.1']
    %11 = vsyncpa [#allocation3], 0
    // Predicated region
    $region2: #{lightweight_lstm_forward.1} parent=1 // pred_check
      _
    $region3: #{lightweight_lstm_forward.1} parent=1 // pred_check_branch
      %13 = sbr.rel (0) target = $region5
    $region4: #{lightweight_lstm_forward.1} parent=1 // pred_region
      _
    $region5: #{lightweight_lstm_forward.1} parent=1 // pred_fallthru
      _
    // Predicated region
    $region6: #{lightweight_lstm_forward.1} parent=1 // pred_check
      _
    $region7: #{lightweight_lstm_forward.1} parent=1 // pred_check_branch
      %15 = sbr.rel (0) target = $region9
    $region8: #{lightweight_lstm_forward.1} parent=1 // pred_region
      _
    $region9: #{lightweight_lstm_forward.1} parent=1 // pred_fallthru
      _
    // Predicated region
    $region10: #{lightweight_lstm_forward.1} parent=1 // pred_check
      _
    $region11: #{lightweight_lstm_forward.1} parent=1 // pred_check_branch
      %17 = sbr.rel (0) target = $region13
    $region12: #{lightweight_lstm_forward.1} parent=1 // pred_region
      _
    $region13: #{lightweight_lstm_forward.1} parent=1 // pred_fallthru
      _
    // Predicated region
    $region14: #{lightweight_lstm_forward.1} parent=1 // pred_check
      _
    $region15: #{lightweight_lstm_forward.1} parent=1 // pred_check_branch
      %19 = sbr.rel (0) target = $region17
    $region16: #{lightweight_lstm_forward.1} parent=1 // pred_region
      _
    $region17: #{lightweight_lstm_forward.1} parent=1 // pred_fallthru
      _
    // Predicated region
    $region18: #{lightweight_lstm_forward.1} parent=1 // pred_check
      _
    $region19: #{lightweight_lstm_forward.1} parent=1 // pred_check_branch
      %21 = sbr.rel (0) target = $region21
    $region20: #{lightweight_lstm_forward.1} parent=1 // pred_region
      _
    $region21: #{lightweight_lstm_forward.1} parent=1 // pred_fallthru
      _
    // Predicated region
    $region22: #{lightweight_lstm_forward.1} parent=1 // pred_check
      _
    $region23: #{lightweight_lstm_forward.1} parent=1 // pred_check_branch
      %23 = sbr.rel (0) target = $region25
    $region24: #{lightweight_lstm_forward.1} parent=1 // pred_region
      _
    $region25: #{lightweight_lstm_forward.1} parent=1 // pred_fallthru
      _
    %v24 = vld [vmem:[%s0] sm:$0xff]
    %v25 = vld [vmem:[%s0 + $0x8] sm:$0xff]
    %v26 = vld [vmem:[%s1] sm:$0xff]
    %v27 = vld [vmem:[%s1 + $0x8] sm:$0xff]
    %v28 = vld [vmem:[%s3] sm:$0x1]
    %v30 = vlaneseq
    %v31 = vshrl.u32 %v30, 7
    %v32 = vsub.s32 0, %v31
    %v33 = vrot.slane %v28, %v32
    %vm35 = vcmask 130048
    %v37 = vsel %vm35, %v24, 0
    %v40 = vsel %vm35, %v25, 0
    %42 = vmatprep.subr.mxu0 0.0
    %43 = vmatpush1.msra.mxu0 %v26
    %44 = vmatprep.subr.mxu0 0.0
    %45 = vmatpush1.msra.mxu0 %v27
    %46 = vmatprep.subr.mxu0 0.0
    %47 = vmatpush1.msra.mxu0 0.0
    %48 = vmatprep.subr.mxu0 0.0
    %49 = vmatpush1.msra.mxu0 0.0
    %50 = vmatprep.subr.mxu0 0.0
    %51 = vmatpush1.msra.mxu0 0.0
    %52 = vmatprep.subr.mxu0 0.0
    %53 = vmatpush1.msra.mxu0 0.0
    %54 = vmatprep.subr.mxu0 0.0
    %55 = vmatpush1.msra.mxu0 0.0
    %56 = vmatprep.subr.mxu0 0.0
    %57 = vmatpush1.msra.mxu0 0.0
    %58 = vmatprep.subr.mxu0 0.0
    %59 = vmatpush1.msra.mxu0 0.0
    %60 = vmatprep.subr.mxu0 0.0
    %61 = vmatpush1.msra.mxu0 0.0
    %62 = vmatprep.subr.mxu0 0.0
    %63 = vmatpush1.msra.mxu0 0.0
    %64 = vmatprep.subr.mxu0 0.0
    %65 = vmatpush1.msra.mxu0 0.0
    %66 = vmatprep.subr.mxu0 0.0
    %67 = vmatpush1.msra.mxu0 0.0
    %68 = vmatprep.subr.mxu0 0.0
    %69 = vmatpush1.msra.mxu0 0.0
    %70 = vmatprep.subr.mxu0 0.0
    %71 = vmatpush1.msra.mxu0 0.0
    %72 = vmatprep.subr.mxu0 0.0
    %73 = vmatpush1.msra.mxu0 0.0
    %74 = vmatprep.subr.mxu0 0.0
    %75 = vmatpush1.msra.mxu0 0.0
    %76 = vmatprep.subr.mxu0 0.0
    %77 = vmatpush1.msra.mxu0 0.0
    %78 = vmatprep.subr.mxu0 0.0
    %79 = vmatpush1.msra.mxu0 0.0
    %80 = vmatprep.subr.mxu0 0.0
    %81 = vmatpush1.msra.mxu0 0.0
    %82 = vmatprep.subr.mxu0 0.0
    %83 = vmatpush1.msra.mxu0 0.0
    %84 = vmatprep.subr.mxu0 0.0
    %85 = vmatpush1.msra.mxu0 0.0
    %86 = vmatprep.subr.mxu0 0.0
    %87 = vmatpush1.msra.mxu0 0.0
    %88 = vmatprep.subr.mxu0 0.0
    %89 = vmatpush1.msra.mxu0 0.0
    %90 = vmatprep.subr.mxu0 0.0
    %91 = vmatpush1.msra.mxu0 0.0
    %92 = vmatprep.subr.mxu0 0.0
    %93 = vmatpush1.msra.mxu0 0.0
    %94 = vmatprep.subr.mxu0 0.0
    %95 = vmatpush1.msra.mxu0 0.0
    %96 = vmatprep.subr.mxu0 0.0
    %97 = vmatpush1.msra.mxu0 0.0
    %98 = vmatprep.subr.mxu0 0.0
    %99 = vmatpush1.msra.mxu0 0.0
    %100 = vmatprep.subr.mxu0 0.0
    %101 = vmatpush1.msra.mxu0 0.0
    %102 = vmatprep.subr.mxu0 0.0
    %103 = vmatpush1.msra.mxu0 0.0
    %104 = vmatprep.subr.mxu0 0.0
    %105 = vmatpush1.msra.mxu0 0.0
    %106 = vmatprep.mubr.f32.mxu0 0.0
    %107 = vmatmul.mubr.f32.gmra.mrb[0].mxu0 %v37
    %v108 = vpop.f32.mrb[0].mxu0
    %v109 = vadd.f32 %v33, %v108
    %v110 = vpop.f32.mrb[0].mxu0
    %111 = vmatprep.mubr.f32.mxu0 0.0
    %112 = vmatmul.mubr.f32.gmra.mrb[0].mxu0 %v40
    %v113 = vpop.f32.mrb[0].mxu0
    %v114 = vadd.f32 %v33, %v113
    %v115 = vpop.f32.mrb[0].mxu0
    %116 = vdwg.mxu0
    %v117 = vld [vmem:[%s2] sm:$0xff]
    %v118 = vld [vmem:[%s2 + $0x8] sm:$0xff]
    %v119 = vld [vmem:[%s2 + $0x10] sm:$0xff]
    %v120 = vld [vmem:[%s2 + $0x18] sm:$0xff]
    %vm121 = vcmask 261120
    %v123 = vsel %vm121, 0.0, 0
    %125 = vmatprep.subr.mxu0 0.0
    %126 = vmatpush1.msra.mxu0 %v117
    %127 = vmatprep.subr.mxu0 0.0
    %128 = vmatpush1.msra.mxu0 %v118
    %129 = vmatprep.subr.mxu0 0.0
    %130 = vmatpush1.msra.mxu0 %v119
    %131 = vmatprep.subr.mxu0 0.0
    %132 = vmatpush1.msra.mxu0 %v120
    %133 = vmatprep.subr.mxu0 0.0
    %134 = vmatpush1.msra.mxu0 0.0
    %135 = vmatprep.subr.mxu0 0.0
    %136 = vmatpush1.msra.mxu0 0.0
    %137 = vmatprep.subr.mxu0 0.0
    %138 = vmatpush1.msra.mxu0 0.0
    %139 = vmatprep.subr.mxu0 0.0
    %140 = vmatpush1.msra.mxu0 0.0
    %141 = vmatprep.subr.mxu0 0.0
    %142 = vmatpush1.msra.mxu0 0.0
    %143 = vmatprep.subr.mxu0 0.0
    %144 = vmatpush1.msra.mxu0 0.0
    %145 = vmatprep.subr.mxu0 0.0
    %146 = vmatpush1.msra.mxu0 0.0
    %147 = vmatprep.subr.mxu0 0.0
    %148 = vmatpush1.msra.mxu0 0.0
    %149 = vmatprep.subr.mxu0 0.0
    %150 = vmatpush1.msra.mxu0 0.0
    %151 = vmatprep.subr.mxu0 0.0
    %152 = vmatpush1.msra.mxu0 0.0
    %153 = vmatprep.subr.mxu0 0.0
    %154 = vmatpush1.msra.mxu0 0.0
    %155 = vmatprep.subr.mxu0 0.0
    %156 = vmatpush1.msra.mxu0 0.0
    %157 = vmatprep.subr.mxu0 0.0
    %158 = vmatpush1.msra.mxu0 0.0
    %159 = vmatprep.subr.mxu0 0.0
    %160 = vmatpush1.msra.mxu0 0.0
    %161 = vmatprep.subr.mxu0 0.0
    %162 = vmatpush1.msra.mxu0 0.0
    %163 = vmatprep.subr.mxu0 0.0
    %164 = vmatpush1.msra.mxu0 0.0
    %165 = vmatprep.subr.mxu0 0.0
    %166 = vmatpush1.msra.mxu0 0.0
    %167 = vmatprep.subr.mxu0 0.0
    %168 = vmatpush1.msra.mxu0 0.0
    %169 = vmatprep.subr.mxu0 0.0
    %170 = vmatpush1.msra.mxu0 0.0
    %171 = vmatprep.subr.mxu0 0.0
    %172 = vmatpush1.msra.mxu0 0.0
    %173 = vmatprep.subr.mxu0 0.0
    %174 = vmatpush1.msra.mxu0 0.0
    %175 = vmatprep.subr.mxu0 0.0
    %176 = vmatpush1.msra.mxu0 0.0
    %177 = vmatprep.subr.mxu0 0.0
    %178 = vmatpush1.msra.mxu0 0.0
    %179 = vmatprep.subr.mxu0 0.0
    %180 = vmatpush1.msra.mxu0 0.0
    %181 = vmatprep.subr.mxu0 0.0
    %182 = vmatpush1.msra.mxu0 0.0
    %183 = vmatprep.subr.mxu0 0.0
    %184 = vmatpush1.msra.mxu0 0.0
    %185 = vmatprep.subr.mxu0 0.0
    %186 = vmatpush1.msra.mxu0 0.0
    %187 = vmatprep.subr.mxu0 0.0
    %188 = vmatpush1.msra.mxu0 0.0
    %189 = vmatprep.mubr.f32.mxu0 0.0
    %190 = vmatmul.mubr.f32.gmra.mrb[0].mxu0 %v123
    %v191 = vpop.f32.mrb[0].mxu0
    %v192 = vadd.f32 0.0, %v191
    %v193 = vpop.f32.mrb[0].mxu0
    %194 = vdwg.mxu0
    %v195 = vadd.f32 %v109, %v192
    %v196 = vxor.u32 %v195, 2147483648
    %v197 = vmul.f32 %v196, 1.442695
    %v198 = vpow.pop %v197
    %v199 = vadd.f32 %v198, 1.0
    %v200 = vrcp.pop %v199
    %v201 = vmul.f32 1.0, %v200
    %v202 = vtanh.pop %v195
    %v203 = vmul.f32 %v201, 0.0
    %205 = vrot.lane.b32.xlu0 %v202, 64
    %v206 = vpop.permute.xlu0 %205
    %v208 = vmul.f32 %v201, %v206
    %210 = vrot.lane.b32.xlu0 %v208, 32
    %v211 = vpop.permute.xlu0 %210
    %v213 = vadd.f32 %v203, %v211
    %v214 = vtanh.pop %v213
    %216 = vrot.lane.b32.xlu0 %v214, 64
    %v217 = vpop.permute.xlu0 %216
    %v219 = vmul.f32 %v201, %v217
    %221 = vrot.lane.b32.xlu0 %v219, 32
    %v222 = vpop.permute.xlu0 %221
    %v223 = vsel %vm121, %v222, 0
    %225 = vmatprep.subr.mxu0 0.0
    %226 = vmatpush1.msra.mxu0 %v117
    %227 = vmatprep.subr.mxu0 0.0
    %228 = vmatpush1.msra.mxu0 %v118
    %229 = vmatprep.subr.mxu0 0.0
    %230 = vmatpush1.msra.mxu0 %v119
    %231 = vmatprep.subr.mxu0 0.0
    %232 = vmatpush1.msra.mxu0 %v120
    %233 = vmatprep.subr.mxu0 0.0
    %234 = vmatpush1.msra.mxu0 0.0
    %235 = vmatprep.subr.mxu0 0.0
    %236 = vmatpush1.msra.mxu0 0.0
    %237 = vmatprep.subr.mxu0 0.0
    %238 = vmatpush1.msra.mxu0 0.0
    %239 = vmatprep.subr.mxu0 0.0
    %240 = vmatpush1.msra.mxu0 0.0
    %241 = vmatprep.subr.mxu0 0.0
    %242 = vmatpush1.msra.mxu0 0.0
    %243 = vmatprep.subr.mxu0 0.0
    %244 = vmatpush1.msra.mxu0 0.0
    %245 = vmatprep.subr.mxu0 0.0
    %246 = vmatpush1.msra.mxu0 0.0
    %247 = vmatprep.subr.mxu0 0.0
    %248 = vmatpush1.msra.mxu0 0.0
    %249 = vmatprep.subr.mxu0 0.0
    %250 = vmatpush1.msra.mxu0 0.0
    %251 = vmatprep.subr.mxu0 0.0
    %252 = vmatpush1.msra.mxu0 0.0
    %253 = vmatprep.subr.mxu0 0.0
    %254 = vmatpush1.msra.mxu0 0.0
    %255 = vmatprep.subr.mxu0 0.0
    %256 = vmatpush1.msra.mxu0 0.0
    %257 = vmatprep.subr.mxu0 0.0
    %258 = vmatpush1.msra.mxu0 0.0
    %259 = vmatprep.subr.mxu0 0.0
    %260 = vmatpush1.msra.mxu0 0.0
    %261 = vmatprep.subr.mxu0 0.0
    %262 = vmatpush1.msra.mxu0 0.0
    %263 = vmatprep.subr.mxu0 0.0
    %264 = vmatpush1.msra.mxu0 0.0
    %265 = vmatprep.subr.mxu0 0.0
    %266 = vmatpush1.msra.mxu0 0.0
    %267 = vmatprep.subr.mxu0 0.0
    %268 = vmatpush1.msra.mxu0 0.0
    %269 = vmatprep.subr.mxu0 0.0
    %270 = vmatpush1.msra.mxu0 0.0
    %271 = vmatprep.subr.mxu0 0.0
    %272 = vmatpush1.msra.mxu0 0.0
    %273 = vmatprep.subr.mxu0 0.0
    %274 = vmatpush1.msra.mxu0 0.0
    %275 = vmatprep.subr.mxu0 0.0
    %276 = vmatpush1.msra.mxu0 0.0
    %277 = vmatprep.subr.mxu0 0.0
    %278 = vmatpush1.msra.mxu0 0.0
    %279 = vmatprep.subr.mxu0 0.0
    %280 = vmatpush1.msra.mxu0 0.0
    %281 = vmatprep.subr.mxu0 0.0
    %282 = vmatpush1.msra.mxu0 0.0
    %283 = vmatprep.subr.mxu0 0.0
    %284 = vmatpush1.msra.mxu0 0.0
    %285 = vmatprep.subr.mxu0 0.0
    %286 = vmatpush1.msra.mxu0 0.0
    %287 = vmatprep.subr.mxu0 0.0
    %288 = vmatpush1.msra.mxu0 0.0
    %289 = vmatprep.mubr.f32.mxu0 0.0
    %290 = vmatmul.mubr.f32.gmra.mrb[0].mxu0 %v223
    %v291 = vpop.f32.mrb[0].mxu0
    %v292 = vadd.f32 0.0, %v291
    %v293 = vpop.f32.mrb[0].mxu0
    %294 = vdwg.mxu0
    %v296 = vrot.slane %v292, 6
    %v298 = vadd.f32 %v109, %v296
    %v299 = vxor.u32 %v298, 2147483648
    %v300 = vmul.f32 %v299, 1.442695
    %v301 = vpow.pop %v300
    %v302 = vadd.f32 %v301, 1.0
    %v303 = vrcp.pop %v302
    %v304 = vmul.f32 1.0, %v303
    %v305 = vtanh.pop %v298
    %v307 = vrot.slane %v213, 6
    %v309 = vmul.f32 %v304, %v307
    %311 = vrot.lane.b32.xlu0 %v305, 64
    %v312 = vpop.permute.xlu0 %311
    %v314 = vmul.f32 %v304, %v312
    %316 = vrot.lane.b32.xlu0 %v314, 32
    %v317 = vpop.permute.xlu0 %316
    %v319 = vadd.f32 %v309, %v317
    %v320 = vtanh.pop %v319
    %322 = vrot.lane.b32.xlu0 %v320, 64
    %v323 = vpop.permute.xlu0 %322
    %v325 = vmul.f32 %v304, %v323
    %v327 = vrot.slane %v325, 2
    %328 = vrot.lane.b32.xlu0 %v327, 32
    %v329 = vpop.permute.xlu0 %328
    %v330 = vsel %vm121, %v329, 0
    %332 = vmatprep.subr.mxu0 0.0
    %333 = vmatpush1.msra.mxu0 %v117
    %334 = vmatprep.subr.mxu0 0.0
    %335 = vmatpush1.msra.mxu0 %v118
    %336 = vmatprep.subr.mxu0 0.0
    %337 = vmatpush1.msra.mxu0 %v119
    %338 = vmatprep.subr.mxu0 0.0
    %339 = vmatpush1.msra.mxu0 %v120
    %340 = vmatprep.subr.mxu0 0.0
    %341 = vmatpush1.msra.mxu0 0.0
    %342 = vmatprep.subr.mxu0 0.0
    %343 = vmatpush1.msra.mxu0 0.0
    %344 = vmatprep.subr.mxu0 0.0
    %345 = vmatpush1.msra.mxu0 0.0
    %346 = vmatprep.subr.mxu0 0.0
    %347 = vmatpush1.msra.mxu0 0.0
    %348 = vmatprep.subr.mxu0 0.0
    %349 = vmatpush1.msra.mxu0 0.0
    %350 = vmatprep.subr.mxu0 0.0
    %351 = vmatpush1.msra.mxu0 0.0
    %352 = vmatprep.subr.mxu0 0.0
    %353 = vmatpush1.msra.mxu0 0.0
    %354 = vmatprep.subr.mxu0 0.0
    %355 = vmatpush1.msra.mxu0 0.0
    %356 = vmatprep.subr.mxu0 0.0
    %357 = vmatpush1.msra.mxu0 0.0
    %358 = vmatprep.subr.mxu0 0.0
    %359 = vmatpush1.msra.mxu0 0.0
    %360 = vmatprep.subr.mxu0 0.0
    %361 = vmatpush1.msra.mxu0 0.0
    %362 = vmatprep.subr.mxu0 0.0
    %363 = vmatpush1.msra.mxu0 0.0
    %364 = vmatprep.subr.mxu0 0.0
    %365 = vmatpush1.msra.mxu0 0.0
    %366 = vmatprep.subr.mxu0 0.0
    %367 = vmatpush1.msra.mxu0 0.0
    %368 = vmatprep.subr.mxu0 0.0
    %369 = vmatpush1.msra.mxu0 0.0
    %370 = vmatprep.subr.mxu0 0.0
    %371 = vmatpush1.msra.mxu0 0.0
    %372 = vmatprep.subr.mxu0 0.0
    %373 = vmatpush1.msra.mxu0 0.0
    %374 = vmatprep.subr.mxu0 0.0
    %375 = vmatpush1.msra.mxu0 0.0
    %376 = vmatprep.subr.mxu0 0.0
    %377 = vmatpush1.msra.mxu0 0.0
    %378 = vmatprep.subr.mxu0 0.0
    %379 = vmatpush1.msra.mxu0 0.0
    %380 = vmatprep.subr.mxu0 0.0
    %381 = vmatpush1.msra.mxu0 0.0
    %382 = vmatprep.subr.mxu0 0.0
    %383 = vmatpush1.msra.mxu0 0.0
    %384 = vmatprep.subr.mxu0 0.0
    %385 = vmatpush1.msra.mxu0 0.0
    %386 = vmatprep.subr.mxu0 0.0
    %387 = vmatpush1.msra.mxu0 0.0
    %388 = vmatprep.subr.mxu0 0.0
    %389 = vmatpush1.msra.mxu0 0.0
    %390 = vmatprep.subr.mxu0 0.0
    %391 = vmatpush1.msra.mxu0 0.0
    %392 = vmatprep.subr.mxu0 0.0
    %393 = vmatpush1.msra.mxu0 0.0
    %394 = vmatprep.subr.mxu0 0.0
    %395 = vmatpush1.msra.mxu0 0.0
    %396 = vmatprep.mubr.f32.mxu0 0.0
    %397 = vmatmul.mubr.f32.gmra.mrb[0].mxu0 %v330
    %v398 = vpop.f32.mrb[0].mxu0
    %v399 = vadd.f32 0.0, %v398
    %v400 = vpop.f32.mrb[0].mxu0
    %401 = vdwg.mxu0
    %v403 = vrot.slane %v399, 4
    %v405 = vadd.f32 %v109, %v403
    %v406 = vxor.u32 %v405, 2147483648
    %v407 = vmul.f32 %v406, 1.442695
    %v408 = vpow.pop %v407
    %v409 = vadd.f32 %v408, 1.0
    %v410 = vrcp.pop %v409
    %v411 = vmul.f32 1.0, %v410
    %v412 = vtanh.pop %v405
    %v414 = vrot.slane %v319, 6
    %v416 = vmul.f32 %v411, %v414
    %418 = vrot.lane.b32.xlu0 %v412, 64
    %v419 = vpop.permute.xlu0 %418
    %v421 = vmul.f32 %v411, %v419
    %423 = vrot.lane.b32.xlu0 %v421, 32
    %v424 = vpop.permute.xlu0 %423
    %v426 = vadd.f32 %v416, %v424
    %v427 = vtanh.pop %v426
    %429 = vrot.lane.b32.xlu0 %v427, 64
    %v430 = vpop.permute.xlu0 %429
    %v432 = vmul.f32 %v411, %v430
    %v434 = vrot.slane %v432, 4
    %435 = vrot.lane.b32.xlu0 %v434, 32
    %v436 = vpop.permute.xlu0 %435
    %v437 = vsel %vm121, %v436, 0
    %439 = vmatprep.subr.mxu0 0.0
    %440 = vmatpush1.msra.mxu0 %v117
    %441 = vmatprep.subr.mxu0 0.0
    %442 = vmatpush1.msra.mxu0 %v118
    %443 = vmatprep.subr.mxu0 0.0
    %444 = vmatpush1.msra.mxu0 %v119
    %445 = vmatprep.subr.mxu0 0.0
    %446 = vmatpush1.msra.mxu0 %v120
    %447 = vmatprep.subr.mxu0 0.0
    %448 = vmatpush1.msra.mxu0 0.0
    %449 = vmatprep.subr.mxu0 0.0
    %450 = vmatpush1.msra.mxu0 0.0
    %451 = vmatprep.subr.mxu0 0.0
    %452 = vmatpush1.msra.mxu0 0.0
    %453 = vmatprep.subr.mxu0 0.0
    %454 = vmatpush1.msra.mxu0 0.0
    %455 = vmatprep.subr.mxu0 0.0
    %456 = vmatpush1.msra.mxu0 0.0
    %457 = vmatprep.subr.mxu0 0.0
    %458 = vmatpush1.msra.mxu0 0.0
    %459 = vmatprep.subr.mxu0 0.0
    %460 = vmatpush1.msra.mxu0 0.0
    %461 = vmatprep.subr.mxu0 0.0
    %462 = vmatpush1.msra.mxu0 0.0
    %463 = vmatprep.subr.mxu0 0.0
    %464 = vmatpush1.msra.mxu0 0.0
    %465 = vmatprep.subr.mxu0 0.0
    %466 = vmatpush1.msra.mxu0 0.0
    %467 = vmatprep.subr.mxu0 0.0
    %468 = vmatpush1.msra.mxu0 0.0
    %469 = vmatprep.subr.mxu0 0.0
    %470 = vmatpush1.msra.mxu0 0.0
    %471 = vmatprep.subr.mxu0 0.0
    %472 = vmatpush1.msra.mxu0 0.0
    %473 = vmatprep.subr.mxu0 0.0
    %474 = vmatpush1.msra.mxu0 0.0
    %475 = vmatprep.subr.mxu0 0.0
    %476 = vmatpush1.msra.mxu0 0.0
    %477 = vmatprep.subr.mxu0 0.0
    %478 = vmatpush1.msra.mxu0 0.0
    %479 = vmatprep.subr.mxu0 0.0
    %480 = vmatpush1.msra.mxu0 0.0
    %481 = vmatprep.subr.mxu0 0.0
    %482 = vmatpush1.msra.mxu0 0.0
    %483 = vmatprep.subr.mxu0 0.0
    %484 = vmatpush1.msra.mxu0 0.0
    %485 = vmatprep.subr.mxu0 0.0
    %486 = vmatpush1.msra.mxu0 0.0
    %487 = vmatprep.subr.mxu0 0.0
    %488 = vmatpush1.msra.mxu0 0.0
    %489 = vmatprep.subr.mxu0 0.0
    %490 = vmatpush1.msra.mxu0 0.0
    %491 = vmatprep.subr.mxu0 0.0
    %492 = vmatpush1.msra.mxu0 0.0
    %493 = vmatprep.subr.mxu0 0.0
    %494 = vmatpush1.msra.mxu0 0.0
    %495 = vmatprep.subr.mxu0 0.0
    %496 = vmatpush1.msra.mxu0 0.0
    %497 = vmatprep.subr.mxu0 0.0
    %498 = vmatpush1.msra.mxu0 0.0
    %499 = vmatprep.subr.mxu0 0.0
    %500 = vmatpush1.msra.mxu0 0.0
    %501 = vmatprep.subr.mxu0 0.0
    %502 = vmatpush1.msra.mxu0 0.0
    %503 = vmatprep.mubr.f32.mxu0 0.0
    %504 = vmatmul.mubr.f32.gmra.mrb[0].mxu0 %v437
    %v505 = vpop.f32.mrb[0].mxu0
    %v506 = vadd.f32 0.0, %v505
    %v507 = vpop.f32.mrb[0].mxu0
    %508 = vdwg.mxu0
    %v510 = vrot.slane %v506, 2
    %v512 = vadd.f32 %v109, %v510
    %v513 = vxor.u32 %v512, 2147483648
    %v514 = vmul.f32 %v513, 1.442695
    %v515 = vpow.pop %v514
    %v516 = vadd.f32 %v515, 1.0
    %v517 = vrcp.pop %v516
    %v518 = vmul.f32 1.0, %v517
    %v519 = vtanh.pop %v512
    %v521 = vrot.slane %v426, 6
    %v523 = vmul.f32 %v518, %v521
    %525 = vrot.lane.b32.xlu0 %v519, 64
    %v526 = vpop.permute.xlu0 %525
    %v528 = vmul.f32 %v518, %v526
    %530 = vrot.lane.b32.xlu0 %v528, 32
    %v531 = vpop.permute.xlu0 %530
    %v533 = vadd.f32 %v523, %v531
    %v534 = vtanh.pop %v533
    %536 = vrot.lane.b32.xlu0 %v534, 64
    %v537 = vpop.permute.xlu0 %536
    %v539 = vmul.f32 %v518, %v537
    %v541 = vrot.slane %v539, 6
    %542 = vrot.lane.b32.xlu0 %v541, 32
    %v543 = vpop.permute.xlu0 %542
    %v544 = vsel %vm121, %v543, 0
    %546 = vmatprep.subr.mxu0 0.0
    %547 = vmatpush1.msra.mxu0 %v117
    %548 = vmatprep.subr.mxu0 0.0
    %549 = vmatpush1.msra.mxu0 %v118
    %550 = vmatprep.subr.mxu0 0.0
    %551 = vmatpush1.msra.mxu0 %v119
    %552 = vmatprep.subr.mxu0 0.0
    %553 = vmatpush1.msra.mxu0 %v120
    %554 = vmatprep.subr.mxu0 0.0
    %555 = vmatpush1.msra.mxu0 0.0
    %556 = vmatprep.subr.mxu0 0.0
    %557 = vmatpush1.msra.mxu0 0.0
    %558 = vmatprep.subr.mxu0 0.0
    %559 = vmatpush1.msra.mxu0 0.0
    %560 = vmatprep.subr.mxu0 0.0
    %561 = vmatpush1.msra.mxu0 0.0
    %562 = vmatprep.subr.mxu0 0.0
    %563 = vmatpush1.msra.mxu0 0.0
    %564 = vmatprep.subr.mxu0 0.0
    %565 = vmatpush1.msra.mxu0 0.0
    %566 = vmatprep.subr.mxu0 0.0
    %567 = vmatpush1.msra.mxu0 0.0
    %568 = vmatprep.subr.mxu0 0.0
    %569 = vmatpush1.msra.mxu0 0.0
    %570 = vmatprep.subr.mxu0 0.0
    %571 = vmatpush1.msra.mxu0 0.0
    %572 = vmatprep.subr.mxu0 0.0
    %573 = vmatpush1.msra.mxu0 0.0
    %574 = vmatprep.subr.mxu0 0.0
    %575 = vmatpush1.msra.mxu0 0.0
    %576 = vmatprep.subr.mxu0 0.0
    %577 = vmatpush1.msra.mxu0 0.0
    %578 = vmatprep.subr.mxu0 0.0
    %579 = vmatpush1.msra.mxu0 0.0
    %580 = vmatprep.subr.mxu0 0.0
    %581 = vmatpush1.msra.mxu0 0.0
    %582 = vmatprep.subr.mxu0 0.0
    %583 = vmatpush1.msra.mxu0 0.0
    %584 = vmatprep.subr.mxu0 0.0
    %585 = vmatpush1.msra.mxu0 0.0
    %586 = vmatprep.subr.mxu0 0.0
    %587 = vmatpush1.msra.mxu0 0.0
    %588 = vmatprep.subr.mxu0 0.0
    %589 = vmatpush1.msra.mxu0 0.0
    %590 = vmatprep.subr.mxu0 0.0
    %591 = vmatpush1.msra.mxu0 0.0
    %592 = vmatprep.subr.mxu0 0.0
    %593 = vmatpush1.msra.mxu0 0.0
    %594 = vmatprep.subr.mxu0 0.0
    %595 = vmatpush1.msra.mxu0 0.0
    %596 = vmatprep.subr.mxu0 0.0
    %597 = vmatpush1.msra.mxu0 0.0
    %598 = vmatprep.subr.mxu0 0.0
    %599 = vmatpush1.msra.mxu0 0.0
    %600 = vmatprep.subr.mxu0 0.0
    %601 = vmatpush1.msra.mxu0 0.0
    %602 = vmatprep.subr.mxu0 0.0
    %603 = vmatpush1.msra.mxu0 0.0
    %604 = vmatprep.subr.mxu0 0.0
    %605 = vmatpush1.msra.mxu0 0.0
    %606 = vmatprep.subr.mxu0 0.0
    %607 = vmatpush1.msra.mxu0 0.0
    %608 = vmatprep.subr.mxu0 0.0
    %609 = vmatpush1.msra.mxu0 0.0
    %610 = vmatprep.mubr.f32.mxu0 0.0
    %611 = vmatmul.mubr.f32.gmra.mrb[0].mxu0 %v544
    %v612 = vpop.f32.mrb[0].mxu0
    %v613 = vadd.f32 0.0, %v612
    %v614 = vpop.f32.mrb[0].mxu0
    %615 = vdwg.mxu0
    %v616 = vadd.f32 %v114, %v613
    %v617 = vxor.u32 %v616, 2147483648
    %v618 = vmul.f32 %v617, 1.442695
    %v619 = vpow.pop %v618
    %v620 = vadd.f32 %v619, 1.0
    %v621 = vrcp.pop %v620
    %v622 = vmul.f32 1.0, %v621
    %v623 = vtanh.pop %v616
    %v625 = vrot.slane %v533, 6
    %v627 = vmul.f32 %v622, %v625
    %629 = vrot.lane.b32.xlu0 %v623, 64
    %v630 = vpop.permute.xlu0 %629
    %v632 = vmul.f32 %v622, %v630
    %634 = vrot.lane.b32.xlu0 %v632, 32
    %v635 = vpop.permute.xlu0 %634
    %v637 = vadd.f32 %v627, %v635
    %v638 = vtanh.pop %v637
    %640 = vrot.lane.b32.xlu0 %v638, 64
    %v641 = vpop.permute.xlu0 %640
    %v643 = vmul.f32 %v622, %v641
    %645 = vrot.lane.b32.xlu0 %v643, 32
    %v646 = vpop.permute.xlu0 %645
    %v647 = vsel %vm121, %v646, 0
    %649 = vmatprep.subr.mxu0 0.0
    %650 = vmatpush1.msra.mxu0 %v117
    %651 = vmatprep.subr.mxu0 0.0
    %652 = vmatpush1.msra.mxu0 %v118
    %653 = vmatprep.subr.mxu0 0.0
    %654 = vmatpush1.msra.mxu0 %v119
    %655 = vmatprep.subr.mxu0 0.0
    %656 = vmatpush1.msra.mxu0 %v120
    %657 = vmatprep.subr.mxu0 0.0
    %658 = vmatpush1.msra.mxu0 0.0
    %659 = vmatprep.subr.mxu0 0.0
    %660 = vmatpush1.msra.mxu0 0.0
    %661 = vmatprep.subr.mxu0 0.0
    %662 = vmatpush1.msra.mxu0 0.0
    %663 = vmatprep.subr.mxu0 0.0
    %664 = vmatpush1.msra.mxu0 0.0
    %665 = vmatprep.subr.mxu0 0.0
    %666 = vmatpush1.msra.mxu0 0.0
    %667 = vmatprep.subr.mxu0 0.0
    %668 = vmatpush1.msra.mxu0 0.0
    %669 = vmatprep.subr.mxu0 0.0
    %670 = vmatpush1.msra.mxu0 0.0
    %671 = vmatprep.subr.mxu0 0.0
    %672 = vmatpush1.msra.mxu0 0.0
    %673 = vmatprep.subr.mxu0 0.0
    %674 = vmatpush1.msra.mxu0 0.0
    %675 = vmatprep.subr.mxu0 0.0
    %676 = vmatpush1.msra.mxu0 0.0
    %677 = vmatprep.subr.mxu0 0.0
    %678 = vmatpush1.msra.mxu0 0.0
    %679 = vmatprep.subr.mxu0 0.0
    %680 = vmatpush1.msra.mxu0 0.0
    %681 = vmatprep.subr.mxu0 0.0
    %682 = vmatpush1.msra.mxu0 0.0
    %683 = vmatprep.subr.mxu0 0.0
    %684 = vmatpush1.msra.mxu0 0.0
    %685 = vmatprep.subr.mxu0 0.0
    %686 = vmatpush1.msra.mxu0 0.0
    %687 = vmatprep.subr.mxu0 0.0
    %688 = vmatpush1.msra.mxu0 0.0
    %689 = vmatprep.subr.mxu0 0.0
    %690 = vmatpush1.msra.mxu0 0.0
    %691 = vmatprep.subr.mxu0 0.0
    %692 = vmatpush1.msra.mxu0 0.0
    %693 = vmatprep.subr.mxu0 0.0
    %694 = vmatpush1.msra.mxu0 0.0
    %695 = vmatprep.subr.mxu0 0.0
    %696 = vmatpush1.msra.mxu0 0.0
    %697 = vmatprep.subr.mxu0 0.0
    %698 = vmatpush1.msra.mxu0 0.0
    %699 = vmatprep.subr.mxu0 0.0
    %700 = vmatpush1.msra.mxu0 0.0
    %701 = vmatprep.subr.mxu0 0.0
    %702 = vmatpush1.msra.mxu0 0.0
    %703 = vmatprep.subr.mxu0 0.0
    %704 = vmatpush1.msra.mxu0 0.0
    %705 = vmatprep.subr.mxu0 0.0
    %706 = vmatpush1.msra.mxu0 0.0
    %707 = vmatprep.subr.mxu0 0.0
    %708 = vmatpush1.msra.mxu0 0.0
    %709 = vmatprep.subr.mxu0 0.0
    %710 = vmatpush1.msra.mxu0 0.0
    %711 = vmatprep.subr.mxu0 0.0
    %712 = vmatpush1.msra.mxu0 0.0
    %713 = vmatprep.mubr.f32.mxu0 0.0
    %714 = vmatmul.mubr.f32.gmra.mrb[0].mxu0 %v647
    %v715 = vpop.f32.mrb[0].mxu0
    %v716 = vadd.f32 0.0, %v715
    %v717 = vpop.f32.mrb[0].mxu0
    %718 = vdwg.mxu0
    %v720 = vrot.slane %v716, 6
    %v722 = vadd.f32 %v114, %v720
    %v723 = vxor.u32 %v722, 2147483648
    %v724 = vmul.f32 %v723, 1.442695
    %v725 = vpow.pop %v724
    %v726 = vadd.f32 %v725, 1.0
    %v727 = vrcp.pop %v726
    %v728 = vmul.f32 1.0, %v727
    %v729 = vtanh.pop %v722
    %v731 = vrot.slane %v637, 6
    %v733 = vmul.f32 %v728, %v731
    %735 = vrot.lane.b32.xlu0 %v729, 64
    %v736 = vpop.permute.xlu0 %735
    %v738 = vmul.f32 %v728, %v736
    %740 = vrot.lane.b32.xlu0 %v738, 32
    %v741 = vpop.permute.xlu0 %740
    %v743 = vadd.f32 %v733, %v741
    %v744 = vtanh.pop %v743
    %746 = vrot.lane.b32.xlu0 %v744, 64
    %v747 = vpop.permute.xlu0 %746
    %v749 = vmul.f32 %v728, %v747
    %v751 = vrot.slane %v749, 2
    %752 = vrot.lane.b32.xlu0 %v751, 32
    %v753 = vpop.permute.xlu0 %752
    %v754 = vsel %vm121, %v753, 0
    %756 = vmatprep.subr.mxu0 0.0
    %757 = vmatpush1.msra.mxu0 %v117
    %758 = vmatprep.subr.mxu0 0.0
    %759 = vmatpush1.msra.mxu0 %v118
    %760 = vmatprep.subr.mxu0 0.0
    %761 = vmatpush1.msra.mxu0 %v119
    %762 = vmatprep.subr.mxu0 0.0
    %763 = vmatpush1.msra.mxu0 %v120
    %764 = vmatprep.subr.mxu0 0.0
    %765 = vmatpush1.msra.mxu0 0.0
    %766 = vmatprep.subr.mxu0 0.0
    %767 = vmatpush1.msra.mxu0 0.0
    %768 = vmatprep.subr.mxu0 0.0
    %769 = vmatpush1.msra.mxu0 0.0
    %770 = vmatprep.subr.mxu0 0.0
    %771 = vmatpush1.msra.mxu0 0.0
    %772 = vmatprep.subr.mxu0 0.0
    %773 = vmatpush1.msra.mxu0 0.0
    %774 = vmatprep.subr.mxu0 0.0
    %775 = vmatpush1.msra.mxu0 0.0
    %776 = vmatprep.subr.mxu0 0.0
    %777 = vmatpush1.msra.mxu0 0.0
    %778 = vmatprep.subr.mxu0 0.0
    %779 = vmatpush1.msra.mxu0 0.0
    %780 = vmatprep.subr.mxu0 0.0
    %781 = vmatpush1.msra.mxu0 0.0
    %782 = vmatprep.subr.mxu0 0.0
    %783 = vmatpush1.msra.mxu0 0.0
    %784 = vmatprep.subr.mxu0 0.0
    %785 = vmatpush1.msra.mxu0 0.0
    %786 = vmatprep.subr.mxu0 0.0
    %787 = vmatpush1.msra.mxu0 0.0
    %788 = vmatprep.subr.mxu0 0.0
    %789 = vmatpush1.msra.mxu0 0.0
    %790 = vmatprep.subr.mxu0 0.0
    %791 = vmatpush1.msra.mxu0 0.0
    %792 = vmatprep.subr.mxu0 0.0
    %793 = vmatpush1.msra.mxu0 0.0
    %794 = vmatprep.subr.mxu0 0.0
    %795 = vmatpush1.msra.mxu0 0.0
    %796 = vmatprep.subr.mxu0 0.0
    %797 = vmatpush1.msra.mxu0 0.0
    %798 = vmatprep.subr.mxu0 0.0
    %799 = vmatpush1.msra.mxu0 0.0
    %800 = vmatprep.subr.mxu0 0.0
    %801 = vmatpush1.msra.mxu0 0.0
    %802 = vmatprep.subr.mxu0 0.0
    %803 = vmatpush1.msra.mxu0 0.0
    %804 = vmatprep.subr.mxu0 0.0
    %805 = vmatpush1.msra.mxu0 0.0
    %806 = vmatprep.subr.mxu0 0.0
    %807 = vmatpush1.msra.mxu0 0.0
    %808 = vmatprep.subr.mxu0 0.0
    %809 = vmatpush1.msra.mxu0 0.0
    %810 = vmatprep.subr.mxu0 0.0
    %811 = vmatpush1.msra.mxu0 0.0
    %812 = vmatprep.subr.mxu0 0.0
    %813 = vmatpush1.msra.mxu0 0.0
    %814 = vmatprep.subr.mxu0 0.0
    %815 = vmatpush1.msra.mxu0 0.0
    %816 = vmatprep.subr.mxu0 0.0
    %817 = vmatpush1.msra.mxu0 0.0
    %818 = vmatprep.subr.mxu0 0.0
    %819 = vmatpush1.msra.mxu0 0.0
    %820 = vmatprep.mubr.f32.mxu0 0.0
    %821 = vmatmul.mubr.f32.gmra.mrb[0].mxu0 %v754
    %v822 = vpop.f32.mrb[0].mxu0
    %v823 = vadd.f32 0.0, %v822
    %v824 = vpop.f32.mrb[0].mxu0
    %825 = vdwg.mxu0
    %v827 = vrot.slane %v823, 4
    %v829 = vadd.f32 %v114, %v827
    %v830 = vxor.u32 %v829, 2147483648
    %v831 = vmul.f32 %v830, 1.442695
    %v832 = vpow.pop %v831
    %v833 = vadd.f32 %v832, 1.0
    %v834 = vrcp.pop %v833
    %v835 = vmul.f32 1.0, %v834
    %v836 = vtanh.pop %v829
    %v838 = vrot.slane %v743, 6
    %v840 = vmul.f32 %v835, %v838
    %842 = vrot.lane.b32.xlu0 %v836, 64
    %v843 = vpop.permute.xlu0 %842
    %v845 = vmul.f32 %v835, %v843
    %847 = vrot.lane.b32.xlu0 %v845, 32
    %v848 = vpop.permute.xlu0 %847
    %v850 = vadd.f32 %v840, %v848
    %v851 = vtanh.pop %v850
    %853 = vrot.lane.b32.xlu0 %v851, 64
    %v854 = vpop.permute.xlu0 %853
    %v856 = vmul.f32 %v835, %v854
    %v858 = vrot.slane %v856, 4
    %859 = vrot.lane.b32.xlu0 %v858, 32
    %v860 = vpop.permute.xlu0 %859
    %v861 = vsel %vm121, %v860, 0
    %863 = vmatprep.subr.mxu0 0.0
    %864 = vmatpush1.msra.mxu0 %v117
    %865 = vmatprep.subr.mxu0 0.0
    %866 = vmatpush1.msra.mxu0 %v118
    %867 = vmatprep.subr.mxu0 0.0
    %868 = vmatpush1.msra.mxu0 %v119
    %869 = vmatprep.subr.mxu0 0.0
    %870 = vmatpush1.msra.mxu0 %v120
    %871 = vmatprep.subr.mxu0 0.0
    %872 = vmatpush1.msra.mxu0 0.0
    %873 = vmatprep.subr.mxu0 0.0
    %874 = vmatpush1.msra.mxu0 0.0
    %875 = vmatprep.subr.mxu0 0.0
    %876 = vmatpush1.msra.mxu0 0.0
    %877 = vmatprep.subr.mxu0 0.0
    %878 = vmatpush1.msra.mxu0 0.0
    %879 = vmatprep.subr.mxu0 0.0
    %880 = vmatpush1.msra.mxu0 0.0
    %881 = vmatprep.subr.mxu0 0.0
    %882 = vmatpush1.msra.mxu0 0.0
    %883 = vmatprep.subr.mxu0 0.0
    %884 = vmatpush1.msra.mxu0 0.0
    %885 = vmatprep.subr.mxu0 0.0
    %886 = vmatpush1.msra.mxu0 0.0
    %887 = vmatprep.subr.mxu0 0.0
    %888 = vmatpush1.msra.mxu0 0.0
    %889 = vmatprep.subr.mxu0 0.0
    %890 = vmatpush1.msra.mxu0 0.0
    %891 = vmatprep.subr.mxu0 0.0
    %892 = vmatpush1.msra.mxu0 0.0
    %893 = vmatprep.subr.mxu0 0.0
    %894 = vmatpush1.msra.mxu0 0.0
    %895 = vmatprep.subr.mxu0 0.0
    %896 = vmatpush1.msra.mxu0 0.0
    %897 = vmatprep.subr.mxu0 0.0
    %898 = vmatpush1.msra.mxu0 0.0
    %899 = vmatprep.subr.mxu0 0.0
    %900 = vmatpush1.msra.mxu0 0.0
    %901 = vmatprep.subr.mxu0 0.0
    %902 = vmatpush1.msra.mxu0 0.0
    %903 = vmatprep.subr.mxu0 0.0
    %904 = vmatpush1.msra.mxu0 0.0
    %905 = vmatprep.subr.mxu0 0.0
    %906 = vmatpush1.msra.mxu0 0.0
    %907 = vmatprep.subr.mxu0 0.0
    %908 = vmatpush1.msra.mxu0 0.0
    %909 = vmatprep.subr.mxu0 0.0
    %910 = vmatpush1.msra.mxu0 0.0
    %911 = vmatprep.subr.mxu0 0.0
    %912 = vmatpush1.msra.mxu0 0.0
    %913 = vmatprep.subr.mxu0 0.0
    %914 = vmatpush1.msra.mxu0 0.0
    %915 = vmatprep.subr.mxu0 0.0
    %916 = vmatpush1.msra.mxu0 0.0
    %917 = vmatprep.subr.mxu0 0.0
    %918 = vmatpush1.msra.mxu0 0.0
    %919 = vmatprep.subr.mxu0 0.0
    %920 = vmatpush1.msra.mxu0 0.0
    %921 = vmatprep.subr.mxu0 0.0
    %922 = vmatpush1.msra.mxu0 0.0
    %923 = vmatprep.subr.mxu0 0.0
    %924 = vmatpush1.msra.mxu0 0.0
    %925 = vmatprep.subr.mxu0 0.0
    %926 = vmatpush1.msra.mxu0 0.0
    %927 = vmatprep.mubr.f32.mxu0 0.0
    %928 = vmatmul.mubr.f32.gmra.mrb[0].mxu0 %v861
    %v929 = vpop.f32.mrb[0].mxu0
    %v930 = vadd.f32 0.0, %v929
    %v931 = vpop.f32.mrb[0].mxu0
    %932 = vdwg.mxu0
    %v934 = vrot.slane %v930, 2
    %v936 = vadd.f32 %v114, %v934
    %v937 = vxor.u32 %v936, 2147483648
    %v938 = vmul.f32 %v937, 1.442695
    %v939 = vpow.pop %v938
    %v940 = vadd.f32 %v939, 1.0
    %v941 = vrcp.pop %v940
    %v942 = vmul.f32 1.0, %v941
    %v943 = vtanh.pop %v936
    %v945 = vrot.slane %v850, 6
    %v947 = vmul.f32 %v942, %v945
    %949 = vrot.lane.b32.xlu0 %v943, 64
    %v950 = vpop.permute.xlu0 %949
    %v952 = vmul.f32 %v942, %v950
    %954 = vrot.lane.b32.xlu0 %v952, 32
    %v955 = vpop.permute.xlu0 %954
    %v957 = vadd.f32 %v947, %v955
    %v958 = vtanh.pop %v957
    %960 = vrot.lane.b32.xlu0 %v958, 64
    %v961 = vpop.permute.xlu0 %960
    %v963 = vmul.f32 %v942, %v961
    %v964 = vld [vmem:[%s4] sm:$0xff]
    %v965 = vld [vmem:[%s4 + $0x8] sm:$0xff]
    %v966 = vld [vmem:[%s4 + $0x10] sm:$0xff]
    %v967 = vld [vmem:[%s4 + $0x18] sm:$0xff]
    %v968 = vld [vmem:[%s5] sm:$0x1]
    %v970 = vlaneseq
    %v971 = vshrl.u32 %v970, 7
    %v972 = vsub.s32 0, %v971
    %v973 = vrot.slane %v968, %v972
    %v976 = vrot.slane %v963, 6
    %977 = vrot.lane.b32.xlu0 %v976, 32
    %v978 = vpop.permute.xlu0 %977
    %v979 = vsel %vm121, %v978, 0
    %981 = vmatprep.subr.mxu0 0.0
    %982 = vmatpush1.msra.mxu0 %v964
    %983 = vmatprep.subr.mxu0 0.0
    %984 = vmatpush1.msra.mxu0 %v965
    %985 = vmatprep.subr.mxu0 0.0
    %986 = vmatpush1.msra.mxu0 %v966
    %987 = vmatprep.subr.mxu0 0.0
    %988 = vmatpush1.msra.mxu0 %v967
    %989 = vmatprep.subr.mxu0 0.0
    %990 = vmatpush1.msra.mxu0 0.0
    %991 = vmatprep.subr.mxu0 0.0
    %992 = vmatpush1.msra.mxu0 0.0
    %993 = vmatprep.subr.mxu0 0.0
    %994 = vmatpush1.msra.mxu0 0.0
    %995 = vmatprep.subr.mxu0 0.0
    %996 = vmatpush1.msra.mxu0 0.0
    %997 = vmatprep.subr.mxu0 0.0
    %998 = vmatpush1.msra.mxu0 0.0
    %999 = vmatprep.subr.mxu0 0.0
    %1000 = vmatpush1.msra.mxu0 0.0
    %1001 = vmatprep.subr.mxu0 0.0
    %1002 = vmatpush1.msra.mxu0 0.0
    %1003 = vmatprep.subr.mxu0 0.0
    %1004 = vmatpush1.msra.mxu0 0.0
    %1005 = vmatprep.subr.mxu0 0.0
    %1006 = vmatpush1.msra.mxu0 0.0
    %1007 = vmatprep.subr.mxu0 0.0
    %1008 = vmatpush1.msra.mxu0 0.0
    %1009 = vmatprep.subr.mxu0 0.0
    %1010 = vmatpush1.msra.mxu0 0.0
    %1011 = vmatprep.subr.mxu0 0.0
    %1012 = vmatpush1.msra.mxu0 0.0
    %1013 = vmatprep.subr.mxu0 0.0
    %1014 = vmatpush1.msra.mxu0 0.0
    %1015 = vmatprep.subr.mxu0 0.0
    %1016 = vmatpush1.msra.mxu0 0.0
    %1017 = vmatprep.subr.mxu0 0.0
    %1018 = vmatpush1.msra.mxu0 0.0
    %1019 = vmatprep.subr.mxu0 0.0
    %1020 = vmatpush1.msra.mxu0 0.0
    %1021 = vmatprep.subr.mxu0 0.0
    %1022 = vmatpush1.msra.mxu0 0.0
    %1023 = vmatprep.subr.mxu0 0.0
    %1024 = vmatpush1.msra.mxu0 0.0
    %1025 = vmatprep.subr.mxu0 0.0
    %1026 = vmatpush1.msra.mxu0 0.0
    %1027 = vmatprep.subr.mxu0 0.0
    %1028 = vmatpush1.msra.mxu0 0.0
    %1029 = vmatprep.subr.mxu0 0.0
    %1030 = vmatpush1.msra.mxu0 0.0
    %1031 = vmatprep.subr.mxu0 0.0
    %1032 = vmatpush1.msra.mxu0 0.0
    %1033 = vmatprep.subr.mxu0 0.0
    %1034 = vmatpush1.msra.mxu0 0.0
    %1035 = vmatprep.subr.mxu0 0.0
    %1036 = vmatpush1.msra.mxu0 0.0
    %1037 = vmatprep.subr.mxu0 0.0
    %1038 = vmatpush1.msra.mxu0 0.0
    %1039 = vmatprep.subr.mxu0 0.0
    %1040 = vmatpush1.msra.mxu0 0.0
    %1041 = vmatprep.subr.mxu0 0.0
    %1042 = vmatpush1.msra.mxu0 0.0
    %1043 = vmatprep.subr.mxu0 0.0
    %1044 = vmatpush1.msra.mxu0 0.0
    %1045 = vmatprep.mubr.f32.mxu0 0.0
    %1046 = vmatmul.mubr.f32.gmra.mrb[0].mxu0 %v979
    %v1047 = vpop.f32.mrb[0].mxu0
    %v1048 = vadd.f32 %v973, %v1047
    %v1049 = vpop.f32.mrb[0].mxu0
    %1050 = vdwg.mxu0
    %vm1051 = vcmask 58368
    %1052 = vst.msk [vmem:[#allocation2] sm:$0x3] %vm1051, %v1048
    // Predicated region
    $region26: #{lightweight_lstm_forward.1} parent=1 // pred_check
      _
    $region27: #{lightweight_lstm_forward.1} parent=1 // pred_check_branch
      %1054 = sbr.rel (0) target = $region29
    $region28: #{lightweight_lstm_forward.1} parent=1 // pred_region
      %s1056 = ssub.s32 32, 32
      %1057 = vsyncadd [#allocation3], %s1056
      %s1059 = sshll.u32 [#allocation2], 4
      %s1060 = int_to_ptr.vmem [resolvable:$true] %s1059
      %1062 = dma.vmem_to_hbm [thread:$0]  %s1060, 32, %s6, [#allocation3]
    $region29: #{lightweight_lstm_forward.1} parent=1 // pred_fallthru
      _
    // Predicated region
    $region30: #{lightweight_lstm_forward.1} parent=1 // pred_check
      _
    $region31: #{lightweight_lstm_forward.1} parent=1 // pred_check_branch
      %1064 = sbr.rel (0) target = $region33
    $region32: #{lightweight_lstm_forward.1} parent=1 // pred_region
      %1065 = dma.done [#allocation3], 32
    $region33: #{lightweight_lstm_forward.1} parent=1 // pred_fallthru
      _
    %1066 = vsyncpa [#allocation3], 1

</llo_original>
